<compile_context>
chip_gen: v6e
topology: v6e:2x2x1
jax: 0.10.0
libtpu: 0.0.40
codegen_flags: <defaults>
</compile_context>

<pallas_src>
import functools

import jax
import jax.numpy as jnp
import numpy as np
from jax.experimental import pallas as pl
from jax.experimental.pallas import tpu as pltpu


def _wce_kernel(logits_ref, tgt_ref, num_ref, den_ref, acc_num_ref, acc_den_ref,
                *, class_weights, ignore_index, total_rows, grid_r_split,
                tile_rows, need_row_mask):
    C = logits_ref.shape[1]
    p = pl.program_id(1)          # spatial split index (parallel)
    r = pl.program_id(2)          # row-tile index within the split (reduction)
    nr = pl.num_programs(2)

    @pl.when(r == 0)
    def _init():
        acc_num_ref[...] = jnp.zeros_like(acc_num_ref)
        acc_den_ref[...] = jnp.zeros_like(acc_den_ref)

    t = tgt_ref[0, 0]                                   # (TR, 128) int32
    valid = t != ignore_index                           # (TR, 128) bool

    if need_row_mask:
        # Mask rows past the real extent: covers the partial last row-block AND
        # deduplicates clamped (split, r) combinations (their row ids are >= R).
        blk = p * grid_r_split + r
        rows = jax.lax.broadcasted_iota(jnp.int32, t.shape, 0) + blk * tile_rows
        valid = jnp.logical_and(valid, rows < total_rows)

    # Class axis is a leading, non-tiled axis: per-class (TR, 128) slabs, so the
    # "reductions" over C are plain VALU ops across full vregs (no XLU).
    xs = [logits_ref[0, c].astype(jnp.float32) for c in range(C)]
    m = xs[0]
    for c in range(1, C):
        m = jnp.maximum(m, xs[c])

    se = jnp.zeros_like(m)
    picked = jnp.zeros_like(m)
    w_t = jnp.zeros_like(m)
    for c in range(C):
        xc = xs[c]
        se = se + jnp.exp(xc - m)                       # EUP
        eq = t == c                                     # reused for pick + weight
        picked = jnp.where(eq, xc, picked)
        w_t = jnp.where(eq, jnp.float32(class_weights[c]), w_t)

    lse = m + jnp.log(se)
    nll = lse - picked                                  # -log softmax[target]

    # Guard the contribution (not the inputs): any NaN/Inf from garbage overhang
    # rows is dropped by the select.
    acc_num_ref[...] += jnp.where(valid, w_t * nll, 0.0)
    acc_den_ref[...] += jnp.where(valid, w_t, 0.0)

    # Single cross-lane reduce + tiny store, once per (n, split).
    @pl.when(r == nr - 1)
    def _fin():
        num_ref[...] = jnp.sum(acc_num_ref[...]).reshape(1, 1, 1)
        den_ref[...] = jnp.sum(acc_den_ref[...]).reshape(1, 1, 1)


def weighted_cross_entropy(logits_nchw, target, class_weights, ignore_index, *,
                           tile_rows=None):
    """logits_nchw: (N, C, H, W); target: (N, H, W) int; class_weights: python floats."""
    N, C, H, W = logits_nchw.shape
    assert len(class_weights) == C
    S = H * W
    itemsize = jnp.dtype(logits_nchw.dtype).itemsize

    # Free view in the common case; ragged S gets a one-time pad (targets padded
    # with ignore_index so padded pixels contribute exactly 0).
    s_pad = ((S + 127) // 128) * 128
    if s_pad != S:
        pad = s_pad - S
        logits_flat = jnp.pad(logits_nchw.reshape(N, C, S), ((0, 0), (0, 0), (0, pad)))
        tgt_flat = jnp.pad(target.reshape(N, S).astype(jnp.int32), ((0, 0), (0, pad)),
                           constant_values=ignore_index)
    else:
        logits_flat = logits_nchw.reshape(N, C, S)
        tgt_flat = target.reshape(N, S).astype(jnp.int32)
    R = s_pad // 128
    logits4 = logits_flat.reshape(N, C, R, 128)
    tgt4 = tgt_flat.reshape(N, 1, R, 128)
    # TODO(synk): int16 targets would cut HBM traffic another ~10%; kept int32 for
    # sub-32-bit sublane-packing simplicity.

    # Generation-aware VMEM limit (v7x has 64 MiB/TC, v5e/v6e 128 MiB).
    try:
        info = pltpu.get_tpu_info()
        vmem_cap = int(getattr(info, "vmem_capacity_bytes", 64 * 1024 * 1024))
    except Exception:
        vmem_cap = 64 * 1024 * 1024
    vmem_limit = max(min(vmem_cap * 3 // 4, 96 * 1024 * 1024), 32 * 1024 * 1024)

    # Honest per-128-wide-row accounting: 2x double-buffered logits block,
    # 2x int32 target block, 2 f32 scratch accumulators, ~(C+4) live f32 temps.
    bytes_per_row = 128 * (2 * C * itemsize + 2 * 4 + 2 * 4 + (C + 4) * 4)
    tr = int(vmem_limit * 0.8) // bytes_per_row
    if tile_rows is not None:
        tr = int(tile_rows)
    if tr >= R:
        tr = R                                # full extent — always a legal block dim
    else:
        tr = max(8, (tr // 8) * 8)            # (8, 128)-aligned sublane tile
    grid_r = pl.cdiv(R, tr)

    # Guarantee both v7x TensorCores get work when N == 1: 2-way parallel split
    # of the row-block axis (harmless no-op on single-TC chips).
    n_splits = 2 if N == 1 else 1
    grid_r_split = pl.cdiv(grid_r, n_splits)
    need_row_mask = (n_splits * grid_r_split * tr != R)

    if n_splits * grid_r_split > grid_r:
        # Some (split, r) combos point past the last block: clamp in the index
        # map (reads a real block) and let the in-kernel row mask zero them out.
        def blk_idx(p_, r_):
            return jnp.minimum(p_ * grid_r_split + r_, grid_r - 1)
    else:
        def blk_idx(p_, r_):
            return p_ * grid_r_split + r_

    logits_map = lambda n, p, r: (n, 0, blk_idx(p, r), 0)
    tgt_map = lambda n, p, r: (n, 0, blk_idx(p, r), 0)
    out_map = lambda n, p, r: (n, p, 0)

    kernel = functools.partial(
        _wce_kernel,
        class_weights=tuple(float(w) for w in class_weights),
        ignore_index=int(ignore_index),
        total_rows=R,
        grid_r_split=grid_r_split,
        tile_rows=tr,
        need_row_mask=need_row_mask)

    cost = pl.CostEstimate(
        flops=int(6 * C * N * S),
        transcendentals=int((C + 1) * N * S),
        bytes_accessed=int(N * S * (C * itemsize + 4) + N * n_splits * 8))

    num, den = pl.pallas_call(
        kernel,
        out_shape=(jax.ShapeDtypeStruct((N, n_splits, 1), jnp.float32),
                   jax.ShapeDtypeStruct((N, n_splits, 1), jnp.float32)),
        grid_spec=pltpu.PrefetchScalarGridSpec(
            num_scalar_prefetch=0,
            grid=(N, n_splits, grid_r_split),
            in_specs=[
                pl.BlockSpec((1, C, tr, 128), logits_map),
                pl.BlockSpec((1, 1, tr, 128), tgt_map),
            ],
            out_specs=[
                pl.BlockSpec((1, 1, 1), out_map),
                pl.BlockSpec((1, 1, 1), out_map),
            ],
            scratch_shapes=[
                pltpu.VMEM((tr, 128), jnp.float32),
                pltpu.VMEM((tr, 128), jnp.float32),
            ],
        ),
        compiler_params=pltpu.CompilerParams(
            dimension_semantics=("parallel", "parallel", "arbitrary"),
            vmem_limit_bytes=vmem_limit),
        cost_estimate=cost,
    )(logits4, tgt4)

    # reduction='mean' with weights: sum_i w[t_i]*nll_i / sum_i w[t_i] over
    # non-ignored pixels.  If every pixel is ignored, den == 0 -> NaN (matches PyTorch).
    return jnp.sum(num) / jnp.sum(den)


def _reference(logits_nchw, target, class_weights, ignore_index):
    """Pure-JAX reference matching torch.nn.CrossEntropyLoss(weight, ignore_index)."""
    N, C, H, W = logits_nchw.shape
    x = jnp.transpose(logits_nchw, (0, 2, 3, 1)).reshape(-1, C).astype(jnp.float32)
    t = target.reshape(-1).astype(jnp.int32)
    logp = jax.nn.log_softmax(x, axis=-1)
    t_safe = jnp.clip(t, 0, C - 1)
    nll = -jnp.take_along_axis(logp, t_safe[:, None], axis=-1)[:, 0]
    w = jnp.asarray(class_weights, jnp.float32)[t_safe]
    valid = (t != ignore_index).astype(jnp.float32)
    return jnp.sum(valid * w * nll) / jnp.sum(valid * w)


if __name__ == "__main__":
    # Deterministic "module init": distribution -> weights = 1/d (0 if d == 0)
    distribution = [0.1, 0.2, 0.3, 0.4]
    ignore_index = 0
    class_weights = [1.0 / d if d != 0 else 0.0 for d in distribution]

    key = jax.random.PRNGKey(0)

    # Case 1: module-consistent small shapes — logits (N, C, H, W), target (N, H, W).
    N, C, H, W = 2, 4, 16, 16
    k1, k2, k3, k4 = jax.random.split(key, 4)
    logits = jax.random.normal(k1, (N, C, H, W), dtype=jnp.float32)
    target = jax.random.randint(k2, (N, H, W), 0, C, dtype=jnp.int32)
    loss = jax.block_until_ready(
        weighted_cross_entropy(logits, target, class_weights, ignore_index))
    ref = jax.block_until_ready(_reference(logits, target, class_weights, ignore_index))
    np.testing.assert_allclose(np.asarray(loss), np.asarray(ref), rtol=1e-5, atol=1e-5)

    # Case 2: N == 1 exercises the 2-way v7x spatial split, the partial last
    # row-block and the deduplicated (clamped) grid step.
    N2, H2, W2 = 1, 48, 48
    logits2 = jax.random.normal(k3, (N2, C, H2, W2), dtype=jnp.float32)
    target2 = jax.random.randint(k4, (N2, H2, W2), 0, C, dtype=jnp.int32)
    loss2 = jax.block_until_ready(
        weighted_cross_entropy(logits2, target2, class_weights, ignore_index,
                               tile_rows=8))
    ref2 = jax.block_until_ready(_reference(logits2, target2, class_weights, ignore_index))
    np.testing.assert_allclose(np.asarray(loss2), np.asarray(ref2), rtol=1e-5, atol=1e-5)

    print("KERNEL_OK")
</pallas_src>

<mosaic_0001>
module attributes {stable_mosaic.version = 11 : i64} {
  func.func @_wce_kernel(%arg0: i32, %arg1: i32, %arg2: i32, %arg3: memref<1x4x2x128xf32, #tpu.memory_space<vmem>>, %arg4: memref<1x1x2x128xi32, #tpu.memory_space<vmem>>, %arg5: memref<1x1x1xf32, #tpu.memory_space<vmem>>, %arg6: memref<1x1x1xf32, #tpu.memory_space<vmem>>, %arg7: memref<2x128xf32, #tpu.memory_space<vmem>>, %arg8: memref<2x128xf32, #tpu.memory_space<vmem>>) attributes {dimension_semantics = [#tpu.dimension_semantics<parallel>, #tpu.dimension_semantics<parallel>, #tpu.dimension_semantics<arbitrary>], iteration_bounds = array<i64: 2, 1, 1>, scalar_prefetch = 0 : i64, scratch_operands = 2 : i64, tpu.core_type = #tpu.core_type<tc>, window_params = [{transform_indices = @transform_0, window_bounds = array<i64: 1, 4, 2, 128>}, {transform_indices = @transform_1, window_bounds = array<i64: 1, 1, 2, 128>}, {transform_indices = @transform_2, window_bounds = array<i64: 1, 1, 1>}, {transform_indices = @transform_3, window_bounds = array<i64: 1, 1, 1>}]} {
    %c0_i32 = arith.constant 0 : i32
    %0 = arith.cmpi eq, %arg2, %c0_i32 : i32
    %1 = arith.extui %0 : i1 to i32
    %c0_i32_0 = arith.constant 0 : i32
    %2 = arith.cmpi ne, %1, %c0_i32_0 : i32
    scf.if %2 {
      %cst_37 = arith.constant 0.000000e+00 : f32
      %70 = vector.broadcast %cst_37 : f32 to vector<2x128xf32>
      %c0_38 = arith.constant 0 : index
      %c0_39 = arith.constant 0 : index
      %71 = vector.load %arg7[%c0_38, %c0_39] : memref<2x128xf32, #tpu.memory_space<vmem>>, vector<2x128xf32>
      tpu.vector_store %arg7[%c0_38, %c0_39], %70 {strides = array<i32>} : memref<2x128xf32, #tpu.memory_space<vmem>>, vector<2x128xf32>,
      %cst_40 = arith.constant 0.000000e+00 : f32
      %72 = vector.broadcast %cst_40 : f32 to vector<2x128xf32>
      %c0_41 = arith.constant 0 : index
      %c0_42 = arith.constant 0 : index
      %73 = vector.load %arg8[%c0_41, %c0_42] : memref<2x128xf32, #tpu.memory_space<vmem>>, vector<2x128xf32>
      tpu.vector_store %arg8[%c0_41, %c0_42], %72 {strides = array<i32>} : memref<2x128xf32, #tpu.memory_space<vmem>>, vector<2x128xf32>,
    } else {
    }
    %c0 = arith.constant 0 : index
    %c0_1 = arith.constant 0 : index
    %c0_2 = arith.constant 0 : index
    %c0_3 = arith.constant 0 : index
    %3 = vector.load %arg4[%c0, %c0_1, %c0_2, %c0_3] : memref<1x1x2x128xi32, #tpu.memory_space<vmem>>, vector<1x1x2x128xi32>
    %4 = vector.shape_cast %3 : vector<1x1x2x128xi32> to vector<2x128xi32>
    %c0_i32_4 = arith.constant 0 : i32
    %5 = vector.broadcast %c0_i32_4 : i32 to vector<2x128xi32>
    %6 = arith.cmpi ne, %4, %5 : vector<2x128xi32>
    %c0_5 = arith.constant 0 : index
    %c0_6 = arith.constant 0 : index
    %c0_7 = arith.constant 0 : index
    %c0_8 = arith.constant 0 : index
    %7 = vector.load %arg3[%c0_5, %c0_6, %c0_7, %c0_8] : memref<1x4x2x128xf32, #tpu.memory_space<vmem>>, vector<1x1x2x128xf32>
    %8 = vector.shape_cast %7 : vector<1x1x2x128xf32> to vector<2x128xf32>
    %c0_9 = arith.constant 0 : index
    %c1 = arith.constant 1 : index
    %c0_10 = arith.constant 0 : index
    %c0_11 = arith.constant 0 : index
    %9 = vector.load %arg3[%c0_9, %c1, %c0_10, %c0_11] : memref<1x4x2x128xf32, #tpu.memory_space<vmem>>, vector<1x1x2x128xf32>
    %10 = vector.shape_cast %9 : vector<1x1x2x128xf32> to vector<2x128xf32>
    %c0_12 = arith.constant 0 : index
    %c2 = arith.constant 2 : index
    %c0_13 = arith.constant 0 : index
    %c0_14 = arith.constant 0 : index
    %11 = vector.load %arg3[%c0_12, %c2, %c0_13, %c0_14] : memref<1x4x2x128xf32, #tpu.memory_space<vmem>>, vector<1x1x2x128xf32>
    %12 = vector.shape_cast %11 : vector<1x1x2x128xf32> to vector<2x128xf32>
    %c0_15 = arith.constant 0 : index
    %c3 = arith.constant 3 : index
    %c0_16 = arith.constant 0 : index
    %c0_17 = arith.constant 0 : index
    %13 = vector.load %arg3[%c0_15, %c3, %c0_16, %c0_17] : memref<1x4x2x128xf32, #tpu.memory_space<vmem>>, vector<1x1x2x128xf32>
    %14 = vector.shape_cast %13 : vector<1x1x2x128xf32> to vector<2x128xf32>
    %15 = arith.maximumf %8, %10 : vector<2x128xf32>
    %16 = arith.maximumf %15, %12 : vector<2x128xf32>
    %17 = arith.maximumf %16, %14 : vector<2x128xf32>
    %cst = arith.constant 0.000000e+00 : f32
    %18 = vector.broadcast %cst : f32 to vector<2x128xf32>
    %cst_18 = arith.constant 0.000000e+00 : f32
    %19 = vector.broadcast %cst_18 : f32 to vector<2x128xf32>
    %cst_19 = arith.constant 0.000000e+00 : f32
    %20 = vector.broadcast %cst_19 : f32 to vector<2x128xf32>
    %21 = arith.subf %8, %17 : vector<2x128xf32>
    %22 = math.exp %21 : vector<2x128xf32>
    %23 = arith.addf %18, %22 : vector<2x128xf32>
    %c0_i32_20 = arith.constant 0 : i32
    %24 = vector.broadcast %c0_i32_20 : i32 to vector<2x128xi32>
    %25 = arith.cmpi eq, %4, %24 : vector<2x128xi32>
    %26 = arith.select %25, %8, %19 : vector<2x128xi1>, vector<2x128xf32>
    %cst_21 = arith.constant 1.000000e+01 : f32
    %27 = vector.broadcast %cst_21 : f32 to vector<2x128xf32>
    %28 = arith.select %25, %27, %20 : vector<2x128xi1>, vector<2x128xf32>
    %29 = arith.subf %10, %17 : vector<2x128xf32>
    %30 = math.exp %29 : vector<2x128xf32>
    %31 = arith.addf %23, %30 : vector<2x128xf32>
    %c1_i32 = arith.constant 1 : i32
    %32 = vector.broadcast %c1_i32 : i32 to vector<2x128xi32>
    %33 = arith.cmpi eq, %4, %32 : vector<2x128xi32>
    %34 = arith.select %33, %10, %26 : vector<2x128xi1>, vector<2x128xf32>
    %cst_22 = arith.constant 5.000000e+00 : f32
    %35 = vector.broadcast %cst_22 : f32 to vector<2x128xf32>
    %36 = arith.select %33, %35, %28 : vector<2x128xi1>, vector<2x128xf32>
    %37 = arith.subf %12, %17 : vector<2x128xf32>
    %38 = math.exp %37 : vector<2x128xf32>
    %39 = arith.addf %31, %38 : vector<2x128xf32>
    %c2_i32 = arith.constant 2 : i32
    %40 = vector.broadcast %c2_i32 : i32 to vector<2x128xi32>
    %41 = arith.cmpi eq, %4, %40 : vector<2x128xi32>
    %42 = arith.select %41, %12, %34 : vector<2x128xi1>, vector<2x128xf32>
    %cst_23 = arith.constant 3.33333325 : f32
    %43 = vector.broadcast %cst_23 : f32 to vector<2x128xf32>
    %44 = arith.select %41, %43, %36 : vector<2x128xi1>, vector<2x128xf32>
    %45 = arith.subf %14, %17 : vector<2x128xf32>
    %46 = math.exp %45 : vector<2x128xf32>
    %47 = arith.addf %39, %46 : vector<2x128xf32>
    %c3_i32 = arith.constant 3 : i32
    %48 = vector.broadcast %c3_i32 : i32 to vector<2x128xi32>
    %49 = arith.cmpi eq, %4, %48 : vector<2x128xi32>
    %50 = arith.select %49, %14, %42 : vector<2x128xi1>, vector<2x128xf32>
    %cst_24 = arith.constant 2.500000e+00 : f32
    %51 = vector.broadcast %cst_24 : f32 to vector<2x128xf32>
    %52 = arith.select %49, %51, %44 : vector<2x128xi1>, vector<2x128xf32>
    %53 = math.log %47 : vector<2x128xf32>
    %54 = arith.addf %17, %53 : vector<2x128xf32>
    %55 = arith.subf %54, %50 : vector<2x128xf32>
    %c0_25 = arith.constant 0 : index
    %c0_26 = arith.constant 0 : index
    %56 = vector.load %arg7[%c0_25, %c0_26] : memref<2x128xf32, #tpu.memory_space<vmem>>, vector<2x128xf32>
    %57 = arith.mulf %52, %55 : vector<2x128xf32>
    %cst_27 = arith.constant 0.000000e+00 : f32
    %58 = vector.broadcast %cst_27 : f32 to vector<2x128xf32>
    %59 = arith.select %6, %57, %58 : vector<2x128xi1>, vector<2x128xf32>
    %60 = arith.addf %56, %59 : vector<2x128xf32>
    %c0_28 = arith.constant 0 : index
    %c0_29 = arith.constant 0 : index
    %61 = vector.load %arg7[%c0_28, %c0_29] : memref<2x128xf32, #tpu.memory_space<vmem>>, vector<2x128xf32>
    tpu.vector_store %arg7[%c0_28, %c0_29], %60 {strides = array<i32>} : memref<2x128xf32, #tpu.memory_space<vmem>>, vector<2x128xf32>,
    %c0_30 = arith.constant 0 : index
    %c0_31 = arith.constant 0 : index
    %62 = vector.load %arg8[%c0_30, %c0_31] : memref<2x128xf32, #tpu.memory_space<vmem>>, vector<2x128xf32>
    %cst_32 = arith.constant 0.000000e+00 : f32
    %63 = vector.broadcast %cst_32 : f32 to vector<2x128xf32>
    %64 = arith.select %6, %52, %63 : vector<2x128xi1>, vector<2x128xf32>
    %65 = arith.addf %62, %64 : vector<2x128xf32>
    %c0_33 = arith.constant 0 : index
    %c0_34 = arith.constant 0 : index
    %66 = vector.load %arg8[%c0_33, %c0_34] : memref<2x128xf32, #tpu.memory_space<vmem>>, vector<2x128xf32>
    tpu.vector_store %arg8[%c0_33, %c0_34], %65 {strides = array<i32>} : memref<2x128xf32, #tpu.memory_space<vmem>>, vector<2x128xf32>,
    %c0_i32_35 = arith.constant 0 : i32
    %67 = arith.cmpi eq, %arg2, %c0_i32_35 : i32
    %68 = arith.extui %67 : i1 to i32
    %c0_i32_36 = arith.constant 0 : i32
    %69 = arith.cmpi ne, %68, %c0_i32_36 : i32
    scf.if %69 {
      %c0_37 = arith.constant 0 : index
      %c0_38 = arith.constant 0 : index
      %70 = vector.load %arg7[%c0_37, %c0_38] : memref<2x128xf32, #tpu.memory_space<vmem>>, vector<2x128xf32>
      %71 = vector.shape_cast %70 : vector<2x128xf32> to vector<1x2x128xf32>
      %cst_39 = arith.constant dense<0.000000e+00> : vector<1xf32>
      %72 = vector.multi_reduction <add>, %71, %cst_39 [1, 2] : vector<1x2x128xf32> to vector<1xf32>
      %73 = vector.shape_cast %72 : vector<1xf32> to vector<1x1x1xf32>
      %74 = vector.extract %73[0, 0, 0] : f32 from vector<1x1x1xf32>
      %75 = vector.broadcast %74 : f32 to vector<1x1x1xf32>
      %c0_40 = arith.constant 0 : index
      %c0_41 = arith.constant 0 : index
      %c0_42 = arith.constant 0 : index
      %76 = vector.load %arg5[%c0_40, %c0_41, %c0_42] : memref<1x1x1xf32, #tpu.memory_space<vmem>>, vector<1x1x1xf32>
      tpu.vector_store %arg5[%c0_40, %c0_41, %c0_42], %75 {strides = array<i32>} : memref<1x1x1xf32, #tpu.memory_space<vmem>>, vector<1x1x1xf32>,
      %c0_43 = arith.constant 0 : index
      %c0_44 = arith.constant 0 : index
      %77 = vector.load %arg8[%c0_43, %c0_44] : memref<2x128xf32, #tpu.memory_space<vmem>>, vector<2x128xf32>
      %78 = vector.shape_cast %77 : vector<2x128xf32> to vector<1x2x128xf32>
      %cst_45 = arith.constant dense<0.000000e+00> : vector<1xf32>
      %79 = vector.multi_reduction <add>, %78, %cst_45 [1, 2] : vector<1x2x128xf32> to vector<1xf32>
      %80 = vector.shape_cast %79 : vector<1xf32> to vector<1x1x1xf32>
      %81 = vector.extract %80[0, 0, 0] : f32 from vector<1x1x1xf32>
      %82 = vector.broadcast %81 : f32 to vector<1x1x1xf32>
      %c0_46 = arith.constant 0 : index
      %c0_47 = arith.constant 0 : index
      %c0_48 = arith.constant 0 : index
      %83 = vector.load %arg6[%c0_46, %c0_47, %c0_48] : memref<1x1x1xf32, #tpu.memory_space<vmem>>, vector<1x1x1xf32>
      tpu.vector_store %arg6[%c0_46, %c0_47, %c0_48], %82 {strides = array<i32>} : memref<1x1x1xf32, #tpu.memory_space<vmem>>, vector<1x1x1xf32>,
    } else {
    }
    return
  }
  func.func @transform_0(%arg0: i32, %arg1: i32, %arg2: i32) -> (i32, i32, i32, i32) {
    %c1_i32 = arith.constant 1 : i32
    %0 = arith.muli %arg1, %c1_i32 : i32
    %1 = arith.addi %0, %arg2 : i32
    %c0_i32 = arith.constant 0 : i32
    %c0_i32_0 = arith.constant 0 : i32
    %c0_i32_1 = arith.constant 0 : i32
    return %arg0, %c0_i32, %1, %c0_i32_0 : i32, i32, i32, i32
  }
  func.func @transform_1(%arg0: i32, %arg1: i32, %arg2: i32) -> (i32, i32, i32, i32) {
    %c1_i32 = arith.constant 1 : i32
    %0 = arith.muli %arg1, %c1_i32 : i32
    %1 = arith.addi %0, %arg2 : i32
    %c0_i32 = arith.constant 0 : i32
    %c0_i32_0 = arith.constant 0 : i32
    %c0_i32_1 = arith.constant 0 : i32
    return %arg0, %c0_i32, %1, %c0_i32_0 : i32, i32, i32, i32
  }
  func.func @transform_2(%arg0: i32, %arg1: i32, %arg2: i32) -> (i32, i32, i32) {
    %c0_i32 = arith.constant 0 : i32
    %c0_i32_0 = arith.constant 0 : i32
    return %arg0, %arg1, %c0_i32 : i32, i32, i32
  }
  func.func @transform_3(%arg0: i32, %arg1: i32, %arg2: i32) -> (i32, i32, i32) {
    %c0_i32 = arith.constant 0 : i32
    %c0_i32_0 = arith.constant 0 : i32
    return %arg0, %arg1, %c0_i32 : i32, i32, i32
  }
}

</mosaic_0001>

<llo_original>
// kernel: tpu_custom_call.1
$region0: #{tpu_custom_call.1}
  #allocation0 [shape = 'u32[]', space=smem, size = 0x4, offset = 0x4, fixed_abs, tag = 'smem constant byte address 0x4 - core index']
  #allocation1 [shape = 'u32[144,128]{1,0:T(1,128)}', space=vmem, size = 0x12000, scoped, tag = 'internal scratch']
  #allocation2 [shape = 'f32[2,128]{1,0:T(2,128)}', space=vmem, size = 0x400, scoped, tag = 'scratch operand']
  #allocation3 [shape = 'f32[2,128]{1,0:T(2,128)}', space=vmem, size = 0x400, scoped, tag = 'scratch operand']
  %s0 = inlined_call_operand.hbm [shape: f32[2,4,2,128], index: 0, kind: input, shape index: {}]
  %s1 = inlined_call_operand.hbm [shape: s32[2,1,2,128], index: 1, kind: input, shape index: {}]
  %s2 = inlined_call_operand.vmem [shape: f32[2,1,1], index: 2, kind: output, shape index: {0}]
  %s3 = inlined_call_operand.vmem [shape: f32[2,1,1], index: 3, kind: output, shape index: {1}]
  %4 = xla_tuple %s2, %s3
  %s5 = sld [smem:[#allocation0]]
  $region65: #{tpu_custom_call.1} parent=0
    _
  %s7 = ssub.s32 1, %s5
  %s8 = scalar_select 0, %s7, %s5
  $region1: #{tpu_custom_call.1} parent=0
    #allocation4 [shape = 'u8[8192]{0}', space=vmem, size = 0x2000, scoped, tag = 'input window, operand 0']
    #allocation5 [shape = 's32[2]{0}', space=sflag, size = 0x8, scoped, tag = 'scoped memory for tpu_custom_call.1']
    #allocation6 [shape = 'u8[2048]{0}', space=vmem, size = 0x800, scoped, tag = 'input window, operand 1']
    #allocation7 [shape = 's32[2]{0}', space=sflag, size = 0x8, scoped, tag = 'scoped memory for tpu_custom_call.1']
    %9 = vsyncpa [#allocation5], 0
    %s10 = scalar_lea.sflag [#allocation5], 1
    %11 = vsyncpa %s10, 0
    %12 = vsyncpa [#allocation7], 0
    %s13 = scalar_lea.sflag [#allocation7], 1
    %14 = vsyncpa %s13, 0
    loop: start=0, step=1, limit=4
    $region2: #{tpu_custom_call.1} parent=1 // loop_pre_header
      _
    $region3: #{tpu_custom_call.1} parent=1 // loop_header
      %s16 = sphi 0, %s20
      %p17 = scmp.ge.s32.totalorder %s16, 4
      %s23 = sphi 0, %s42
      %s24 = sphi 0, %s38
      %s25 = sphi 0, %s34
      %s26 = sphi 0, %s23
      %s27 = sphi 0, %s24
      %s28 = sphi 0, %s25
      %s29 = sphi 0, %s26
      %s30 = sphi 0, %s27
      %s31 = sphi 0, %s28
      %s49 = sphi 0, %s51
      %s52 = sphi 0, %s49
      %s53 = sphi 0, %s52
      %s69 = sphi 0, %s53
      %s79 = sphi 0, %s81
      %s82 = sphi 0, %s79
      %s83 = sphi 0, %s82
      %s99 = sphi 0, %s83
      %s107 = sphi 0, %s109
      %s110 = sphi 0, %s107
      %s111 = sphi 0, %s110
      %s127 = sphi 0, %s111
      %s135 = sphi 0, %s137
      %s138 = sphi 0, %s135
      %s139 = sphi 0, %s138
      %s155 = sphi 0, %s139
    $region4: #{tpu_custom_call.1} parent=1 // loop_header_branch
      %19 = sbr.rel (%p17) target = $region8
    $region5: #{tpu_custom_call.1} parent=1 // loop_body
      %s21 = ssub.s32 %s16, 1
      %s22 = ssub.s32 %s16, 2
      %s32 = sadd.s32 1, %s25
      %p33 = scmp.ge.s32.totalorder %s32, 1
      %s34 = scalar_select %p33, 0, %s32
      %s35 = sadd.s32 1, %s24
      %s36 = scalar_select %p33, %s35, %s24
      %p37 = scmp.ge.s32.totalorder %s36, 1
      %s38 = scalar_select %p37, 0, %s36
      %s39 = sadd.s32 1, %s23
      %s40 = scalar_select %p37, %s39, %s23
      %p41 = scmp.ge.s32.totalorder %s40, 2
      %s42 = scalar_select %p41, 0, %s40
      %s43 = sadd.s32 %s24, %s25
      %s44 = sadd.s32 %s38, %s34
      %s45 = ssub.s32 %s23, %s42
      %s46 = ssub.s32 %s43, %s44
      %s47 = sor.u32 %s45, %s46
      %p48 = scmp.eq.s32.totalorder %s47, 0
      %s50 = sadd.s32 %s49, 1
      %s51 = scalar_select %p48, %s49, %s50
      %p54 = pneg %p48
      %p55 = scmp.eq.s32.totalorder %s16, 1
      %p56 = por %p54, %p55
      %p57 = scmp.ne.s32.totalorder %s49, %s52
      %p58 = scmp.eq.s32.totalorder %s16, 0
      %p59 = por %p57, %p58
      %p60 = scmp.ne.s32.totalorder %s49, %s52
      %p61 = scmp.eq.s32.totalorder %s21, 1
      %p62 = por %p60, %p61
      %p63 = scmp.ne.s32.totalorder %s52, %s53
      %p64 = scmp.eq.s32.totalorder %s21, 0
      %p65 = por %p63, %p64
      %p66 = scmp.ne.s32.totalorder %s52, %s53
      %p67 = scmp.eq.s32.totalorder %s22, 1
      %p68 = por %p66, %p67
      %p70 = scmp.ne.s32.totalorder %s53, %s69
      %p71 = scmp.eq.s32.totalorder %s22, 0
      %p72 = por %p70, %p71
      %s73 = sadd.s32 %s24, %s25
      %s74 = sadd.s32 %s38, %s34
      %s75 = ssub.s32 %s23, %s42
      %s76 = ssub.s32 %s73, %s74
      %s77 = sor.u32 %s75, %s76
      %p78 = scmp.eq.s32.totalorder %s77, 0
      %s80 = sadd.s32 %s79, 1
      %s81 = scalar_select %p78, %s79, %s80
      %p84 = pneg %p78
      %p85 = scmp.eq.s32.totalorder %s16, 1
      %p86 = por %p84, %p85
      %p87 = scmp.ne.s32.totalorder %s79, %s82
      %p88 = scmp.eq.s32.totalorder %s16, 0
      %p89 = por %p87, %p88
      %p90 = scmp.ne.s32.totalorder %s79, %s82
      %p91 = scmp.eq.s32.totalorder %s21, 1
      %p92 = por %p90, %p91
      %p93 = scmp.ne.s32.totalorder %s82, %s83
      %p94 = scmp.eq.s32.totalorder %s21, 0
      %p95 = por %p93, %p94
      %p96 = scmp.ne.s32.totalorder %s82, %s83
      %p97 = scmp.eq.s32.totalorder %s22, 1
      %p98 = por %p96, %p97
      %p100 = scmp.ne.s32.totalorder %s83, %s99
      %p101 = scmp.eq.s32.totalorder %s22, 0
      %p102 = por %p100, %p101
      %s103 = ssub.s32 %s23, %s42
      %s104 = ssub.s32 %s24, %s38
      %s105 = sor.u32 %s103, %s104
      %p106 = scmp.eq.s32.totalorder %s105, 0
      %s108 = sadd.s32 %s107, 1
      %s109 = scalar_select %p106, %s107, %s108
      %p112 = pneg %p106
      %p113 = scmp.eq.s32.totalorder %s16, 1
      %p114 = por %p112, %p113
      %p115 = scmp.ne.s32.totalorder %s107, %s110
      %p116 = scmp.eq.s32.totalorder %s16, 0
      %p117 = por %p115, %p116
      %p118 = scmp.ne.s32.totalorder %s107, %s110
      %p119 = scmp.eq.s32.totalorder %s21, 1
      %p120 = por %p118, %p119
      %p121 = scmp.ne.s32.totalorder %s110, %s111
      %p122 = scmp.eq.s32.totalorder %s21, 0
      %p123 = por %p121, %p122
      %p124 = scmp.ne.s32.totalorder %s110, %s111
      %p125 = scmp.eq.s32.totalorder %s22, 1
      %p126 = por %p124, %p125
      %p128 = scmp.ne.s32.totalorder %s111, %s127
      %p129 = scmp.eq.s32.totalorder %s22, 0
      %p130 = por %p128, %p129
      %s131 = ssub.s32 %s23, %s42
      %s132 = ssub.s32 %s24, %s38
      %s133 = sor.u32 %s131, %s132
      %p134 = scmp.eq.s32.totalorder %s133, 0
      %s136 = sadd.s32 %s135, 1
      %s137 = scalar_select %p134, %s135, %s136
      %p140 = pneg %p134
      %p141 = scmp.eq.s32.totalorder %s16, 1
      %p142 = por %p140, %p141
      %p143 = scmp.ne.s32.totalorder %s135, %s138
      %p144 = scmp.eq.s32.totalorder %s16, 0
      %p145 = por %p143, %p144
      %p146 = scmp.ne.s32.totalorder %s135, %s138
      %p147 = scmp.eq.s32.totalorder %s21, 1
      %p148 = por %p146, %p147
      %p149 = scmp.ne.s32.totalorder %s138, %s139
      %p150 = scmp.eq.s32.totalorder %s21, 0
      %p151 = por %p149, %p150
      %p152 = scmp.ne.s32.totalorder %s138, %s139
      %p153 = scmp.eq.s32.totalorder %s22, 1
      %p154 = por %p152, %p153
      %p156 = scmp.ne.s32.totalorder %s139, %s155
      %p157 = scmp.eq.s32.totalorder %s22, 0
      %p158 = por %p156, %p157
      %p159 = scmp.le.s32.totalorder 1, %s16
      %p160 = scmp.lt.s32.totalorder %s16, 3
      %p161 = pnand %p159, %p160
      %p162 = pneg %p161
      // Predicated region
      $region9: #{tpu_custom_call.1} parent=5 // pred_check
        _
      $region10: #{tpu_custom_call.1} parent=5 // pred_check_branch
        %164 = sbr.rel (%p161) target = $region12
      $region11: #{tpu_custom_call.1} parent=5 // pred_region
        %s165 = ssub.s32 %s16, 1
      $region12: #{tpu_custom_call.1} parent=5 // pred_fallthru
        _
      %p166 = scmp.lt.s32.totalorder %s16, 2
      // Predicated region
      $region13: #{tpu_custom_call.1} parent=5 // pred_check
        %p167 = pneg %p166
      $region14: #{tpu_custom_call.1} parent=5 // pred_check_branch
        %169 = sbr.rel (%p167) target = $region16
      $region15: #{tpu_custom_call.1} parent=5 // pred_region
        // Predicated region
        $region17: #{tpu_custom_call.1} parent=15 // pred_check
          %p170 = pneg %p59
        $region18: #{tpu_custom_call.1} parent=15 // pred_check_branch
          %172 = sbr.rel (%p170) target = $region20
        $region19: #{tpu_custom_call.1} parent=15 // pred_region
          %s173 = sand.u32 %s49, 1
          %s174 = scalar_lea.sflag [#allocation5], %s173
          %s175 = sand.u32 %s49, 1
          %s176 = smul.addr %s175, 8
          %s177 = scalar_lea.vmem [#allocation4], %s176
          %s178 = sadd.s32 %s24, %s25
          %s180 = ssub.s32 128, 128
          %181 = vsyncadd %s174, %s180
          %s182 = smul.addr %s23, 4
          %s183 = sadd.s32 %s178, %s182
          %s184 = smul.addr %s183, 32
          %s185 = scalar_lea.hbm %s0, %s184
          %s186 = sshll.u32 %s177, 4
          %s187 = int_to_ptr.vmem [resolvable:$true] %s186
          %192 = dma.hbm_to_vmem [thread:$0]  %s185, 128, %s187, %s174, 32, 32, 2
        $region20: #{tpu_custom_call.1} parent=15 // pred_fallthru
          _
        // Predicated region
        $region21: #{tpu_custom_call.1} parent=15 // pred_check
          %p193 = pneg %p89
        $region22: #{tpu_custom_call.1} parent=15 // pred_check_branch
          %195 = sbr.rel (%p193) target = $region24
        $region23: #{tpu_custom_call.1} parent=15 // pred_region
          %s196 = sand.u32 %s79, 1
          %s197 = scalar_lea.sflag [#allocation7], %s196
          %s198 = sand.u32 %s79, 1
          %s199 = smul.addr %s198, 2
          %s200 = scalar_lea.vmem [#allocation6], %s199
          %s201 = sadd.s32 %s24, %s25
          %s203 = ssub.s32 32, 32
          %204 = vsyncadd %s197, %s203
          %s205 = sadd.s32 %s201, %s23
          %s206 = smul.addr %s205, 32
          %s207 = scalar_lea.hbm %s1, %s206
          %s209 = sshll.u32 %s200, 4
          %s210 = int_to_ptr.vmem [resolvable:$true] %s209
          %212 = dma.hbm_to_vmem [thread:$0]  %s207, 32, %s210, %s197
        $region24: #{tpu_custom_call.1} parent=15 // pred_fallthru
          _
      $region16: #{tpu_custom_call.1} parent=5 // pred_fallthru
        _
      %p213 = scmp.le.s32.totalorder 1, %s16
      %p214 = scmp.lt.s32.totalorder %s16, 3
      %p215 = pnand %p213, %p214
      %p216 = pneg %p215
      // Predicated region
      $region25: #{tpu_custom_call.1} parent=5 // pred_check
        _
      $region26: #{tpu_custom_call.1} parent=5 // pred_check_branch
        %218 = sbr.rel (%p215) target = $region28
      $region27: #{tpu_custom_call.1} parent=5 // pred_region
        %s219 = ssub.s32 %s16, 1
        %s220 = sand.u32 %s52, 1
        %s221 = scalar_lea.sflag [#allocation5], %s220
        %s222 = sand.u32 %s52, 1
        %s223 = smul.addr %s222, 8
        %s224 = scalar_lea.vmem [#allocation4], %s223
        // Predicated region
        $region29: #{tpu_custom_call.1} parent=27 // pred_check
          %p225 = pneg %p65
        $region30: #{tpu_custom_call.1} parent=27 // pred_check_branch
          %227 = sbr.rel (%p225) target = $region32
        $region31: #{tpu_custom_call.1} parent=27 // pred_region
          %228 = dma.done %s221, 128
        $region32: #{tpu_custom_call.1} parent=27 // pred_fallthru
          _
        %s229 = sand.u32 %s82, 1
        %s230 = scalar_lea.sflag [#allocation7], %s229
        %s231 = sand.u32 %s82, 1
        %s232 = smul.addr %s231, 2
        %s233 = scalar_lea.vmem [#allocation6], %s232
        // Predicated region
        $region33: #{tpu_custom_call.1} parent=27 // pred_check
          %p234 = pneg %p95
        $region34: #{tpu_custom_call.1} parent=27 // pred_check_branch
          %236 = sbr.rel (%p234) target = $region36
        $region35: #{tpu_custom_call.1} parent=27 // pred_region
          %237 = dma.done %s230, 32
        $region36: #{tpu_custom_call.1} parent=27 // pred_fallthru
          _
        %s238 = sand.u32 %s52, 1
        %s239 = scalar_lea.sflag [#allocation5], %s238
        %s240 = sand.u32 %s52, 1
        %s241 = smul.addr %s240, 8
        %s242 = scalar_lea.vmem [#allocation4], %s241
        %p243 = pneg %p65
        %p244 = pneg %p62
        %s245 = sand.u32 %s82, 1
        %s246 = scalar_lea.sflag [#allocation7], %s245
        %s247 = sand.u32 %s82, 1
        %s248 = smul.addr %s247, 2
        %s249 = scalar_lea.vmem [#allocation6], %s248
        %p250 = pneg %p95
        %p251 = pneg %p92
        %p252 = pneg %p123
        %p253 = pneg %p120
        %p254 = scmp.lt.s32.totalorder %s26, 1
        %s255 = scalar_select %p254, %s26, 1
        %p256 = scmp.lt.s32.totalorder %s27, 0
        %s257 = scalar_select %p256, %s27, 0
        %s258 = sadd.s32 %s257, %s255
        %s259 = scalar_lea.vmem %s2, %s258
        %p260 = pneg %p151
        %p261 = pneg %p148
        %p262 = scmp.lt.s32.totalorder %s26, 1
        %s263 = scalar_select %p262, %s26, 1
        %p264 = scmp.lt.s32.totalorder %s27, 0
        %s265 = scalar_select %p264, %s27, 0
        %s266 = sadd.s32 %s265, %s263
        %s267 = scalar_lea.vmem %s3, %s266
        %s268 = sadd.s32 %s27, %s28
        %s269 = sadd.s32 %s27, %s28
        %p270 = scmp.lt.s32.totalorder %s26, 1
        %s271 = scalar_select %p270, %s26, 1
        %p272 = scmp.lt.s32.totalorder %s27, 0
        %s273 = scalar_select %p272, %s27, 0
        %s274 = sadd.s32 %s273, %s271
        %s275 = scalar_lea.vmem %s2, %s274
        %p276 = scmp.lt.s32.totalorder %s26, 1
        %s277 = scalar_select %p276, %s26, 1
        %p278 = scmp.lt.s32.totalorder %s27, 0
        %s279 = scalar_select %p278, %s27, 0
        %s280 = sadd.s32 %s279, %s277
        %s281 = scalar_lea.vmem %s3, %s280
        %p282 = scmp.eq.s32.totalorder %s28, 0
        // Predicated region
        $region37: #{tpu_custom_call.1} parent=27 // pred_check
          %p283 = pneg %p282
        $region38: #{tpu_custom_call.1} parent=27 // pred_check_branch
          %285 = sbr.rel (%p283) target = $region40
        $region39: #{tpu_custom_call.1} parent=27 // pred_region
          %286 = vst [vmem:[#allocation2] sm:$0x3] 0.0
          %287 = vst [vmem:[#allocation3] sm:$0x3] 0.0
        $region40: #{tpu_custom_call.1} parent=27 // pred_fallthru
          _
        %v288 = vld [vmem:[%s233] sm:$0x3]
        %vm289 = vcmp.ne.s32.totalorder %v288, 0
        %v290 = vld [vmem:[%s224] sm:$0x3]
        %s291 = scalar_lea.vmem %s224, 2 [#allocation4]
        %v292 = vld [vmem:[%s291] sm:$0x3]
        %s293 = scalar_lea.vmem %s224, 4 [#allocation4]
        %v294 = vld [vmem:[%s293] sm:$0x3]
        %s295 = scalar_lea.vmem %s224, 6 [#allocation4]
        %v296 = vld [vmem:[%s295] sm:$0x3]
        %v297 = vmax.f32 %v290, %v292
        %v298 = vmax.f32 %v297, %v294
        %v299 = vmax.f32 %v298, %v296
        %v300 = vsub.f32 %v290, %v299
        %v301 = vmul.f32 %v300, 1.442695
        %v302 = vpow.pop %v301
        %v303 = vadd.f32 %v302, 0.0
        %vm304 = vcmp.eq.s32.totalorder %v288, 0
        %v305 = vsel %vm304, %v290, 0.0
        %v306 = vsel %vm304, 10.0, 0.0
        %v307 = vsub.f32 %v292, %v299
        %v308 = vmul.f32 %v307, 1.442695
        %v309 = vpow.pop %v308
        %v310 = vadd.f32 %v303, %v309
        %vm311 = vcmp.eq.s32.totalorder %v288, 1
        %v312 = vsel %vm311, %v292, %v305
        %v313 = vsel %vm311, 5.0, %v306
        %v314 = vsub.f32 %v294, %v299
        %v315 = vmul.f32 %v314, 1.442695
        %v316 = vpow.pop %v315
        %v317 = vadd.f32 %v310, %v316
        %vm318 = vcmp.eq.s32.totalorder %v288, 2
        %v319 = vsel %vm318, %v294, %v312
        %v320 = vsel %vm318, 3.3333333, %v313
        %v321 = vsub.f32 %v296, %v299
        %v322 = vmul.f32 %v321, 1.442695
        %v323 = vpow.pop %v322
        %v324 = vadd.f32 %v317, %v323
        %vm325 = vcmp.eq.s32.totalorder %v288, 3
        %v326 = vsel %vm325, %v296, %v319
        %v327 = vsel %vm325, 2.5, %v320
        %v328 = vlog2.pop %v324
        %v329 = vmul.f32 %v328, 0.6931472
        %v330 = vadd.f32 %v299, %v329
        %v331 = vsub.f32 %v330, %v326
        %v332 = vld [vmem:[#allocation2] sm:$0x3]
        %v333 = vmul.f32 %v327, %v331
        %v334 = vsel %vm289, %v333, 0.0
        %v335 = vadd.f32 %v332, %v334
        %336 = vst [vmem:[#allocation2] sm:$0x3] %v335
        %v337 = vld [vmem:[#allocation3] sm:$0x3]
        %v338 = vsel %vm289, %v327, 0.0
        %v339 = vadd.f32 %v337, %v338
        %340 = vst [vmem:[#allocation3] sm:$0x3] %v339
        // Predicated region
        $region41: #{tpu_custom_call.1} parent=27 // pred_check
          %p341 = pneg %p282
        $region42: #{tpu_custom_call.1} parent=27 // pred_check_branch
          %343 = sbr.rel (%p341) target = $region44
        $region43: #{tpu_custom_call.1} parent=27 // pred_region
          %v344 = vld [vmem:[#allocation2] sm:$0x3]
          %vm345 = vcmask 1041408
          %v346 = vsel %vm345, %v344, 0.0
          %347 = vadd.xlane.f32.xlu0 %v346
          %v348 = vpop.xlane.xlu0 %347
          %v349 = vrot.slane %v348, 4
          %v350 = vadd.f32 %v348, %v349
          %v351 = vrot.slane %v350, 2
          %v352 = vadd.f32 %v350, %v351
          %v353 = vrot.slane %v352, 1
          %v354 = vadd.f32 %v352, %v353
          %s355 = vtos %v354
          %v356 = vstv %s355
          %vm357 = vcmask 0
          %358 = vst.msk [vmem:[%s275] sm:$0x1] %vm357, %v356
          %v359 = vld [vmem:[#allocation3] sm:$0x3]
          %v360 = vsel %vm345, %v359, 0.0
          %361 = vadd.xlane.f32.xlu0 %v360
          %v362 = vpop.xlane.xlu0 %361
          %v363 = vrot.slane %v362, 4
          %v364 = vadd.f32 %v362, %v363
          %v365 = vrot.slane %v364, 2
          %v366 = vadd.f32 %v364, %v365
          %v367 = vrot.slane %v366, 1
          %v368 = vadd.f32 %v366, %v367
          %s369 = vtos %v368
          %v370 = vstv %s369
          %371 = vst.msk [vmem:[%s281] sm:$0x1] %vm357, %v370
        $region44: #{tpu_custom_call.1} parent=27 // pred_fallthru
          _
        %p372 = scmp.lt.s32.totalorder %s26, 1
        %s373 = scalar_select %p372, %s26, 1
        %p374 = scmp.lt.s32.totalorder %s27, 0
        %s375 = scalar_select %p374, %s27, 0
        %s376 = sadd.s32 %s375, %s373
        %s377 = scalar_lea.vmem %s2, %s376
        %p378 = scmp.lt.s32.totalorder %s26, 1
        %s379 = scalar_select %p378, %s26, 1
        %p380 = scmp.lt.s32.totalorder %s27, 0
        %s381 = scalar_select %p380, %s27, 0
        %s382 = sadd.s32 %s381, %s379
        %s383 = scalar_lea.vmem %s3, %s382
        // Predicated region
        $region45: #{tpu_custom_call.1} parent=27 // pred_check
          %p384 = pneg %p120
        $region46: #{tpu_custom_call.1} parent=27 // pred_check_branch
          %386 = sbr.rel (%p384) target = $region48
        $region47: #{tpu_custom_call.1} parent=27 // pred_region
          _
        $region48: #{tpu_custom_call.1} parent=27 // pred_fallthru
          _
        // Predicated region
        $region49: #{tpu_custom_call.1} parent=27 // pred_check
          %p387 = pneg %p148
        $region50: #{tpu_custom_call.1} parent=27 // pred_check_branch
          %389 = sbr.rel (%p387) target = $region52
        $region51: #{tpu_custom_call.1} parent=27 // pred_region
          _
        $region52: #{tpu_custom_call.1} parent=27 // pred_fallthru
          _
      $region28: #{tpu_custom_call.1} parent=5 // pred_fallthru
        _
      %p390 = scmp.le.s32.totalorder 2, %s16
      // Predicated region
      $region53: #{tpu_custom_call.1} parent=5 // pred_check
        %p391 = pneg %p390
      $region54: #{tpu_custom_call.1} parent=5 // pred_check_branch
        %393 = sbr.rel (%p391) target = $region56
      $region55: #{tpu_custom_call.1} parent=5 // pred_region
        %s394 = ssub.s32 %s16, 2
        // Predicated region
        $region57: #{tpu_custom_call.1} parent=55 // pred_check
          %p395 = pneg %p126
        $region58: #{tpu_custom_call.1} parent=55 // pred_check_branch
          %397 = sbr.rel (%p395) target = $region60
        $region59: #{tpu_custom_call.1} parent=55 // pred_region
          %p398 = scmp.lt.s32.totalorder %s29, 1
          %s399 = scalar_select %p398, %s29, 1
          %p400 = scmp.lt.s32.totalorder %s30, 0
          %s401 = scalar_select %p400, %s30, 0
          %s402 = sadd.s32 %s401, %s399
          %s403 = scalar_lea.vmem %s2, %s402
        $region60: #{tpu_custom_call.1} parent=55 // pred_fallthru
          _
        // Predicated region
        $region61: #{tpu_custom_call.1} parent=55 // pred_check
          %p404 = pneg %p154
        $region62: #{tpu_custom_call.1} parent=55 // pred_check_branch
          %406 = sbr.rel (%p404) target = $region64
        $region63: #{tpu_custom_call.1} parent=55 // pred_region
          %p407 = scmp.lt.s32.totalorder %s29, 1
          %s408 = scalar_select %p407, %s29, 1
          %p409 = scmp.lt.s32.totalorder %s30, 0
          %s410 = scalar_select %p409, %s30, 0
          %s411 = sadd.s32 %s410, %s408
          %s412 = scalar_lea.vmem %s3, %s411
        $region64: #{tpu_custom_call.1} parent=55 // pred_fallthru
          _
      $region56: #{tpu_custom_call.1} parent=5 // pred_fallthru
        _
    $region6: #{tpu_custom_call.1} parent=1 // loop_footer
      %s20 = sadd.s32 1, %s16
    $region7: #{tpu_custom_call.1} parent=1 // loop_footer_branch
      %15 = sbr.rel target = $region3
    $region8: #{tpu_custom_call.1} parent=1 // loop_exit
      _
    %413 = vsyncpa [#allocation5], 1
    %s414 = scalar_lea.sflag [#allocation5], 1
    %415 = vsyncpa %s414, 1
    %416 = vsyncpa [#allocation7], 1
    %s417 = scalar_lea.sflag [#allocation7], 1
    %418 = vsyncpa %s417, 1

</llo_original>
